<compile_context>
chip_gen: v6e
topology: v6e:2x2x1
jax: 0.10.0
libtpu: 0.0.40
codegen_flags: <defaults>
</compile_context>

<pallas_src>
import math

import jax
import jax.numpy as jnp
from jax.experimental import pallas as pl
from jax.experimental.pallas import tpu as pltpu


_NEG_SLOPE = 0.01  # PyTorch nn.LeakyReLU default


def _leaky_relu(x):
    return jnp.where(x > 0, x, _NEG_SLOPE * x)


def mlp_kernel(x_ref, w1_ref, b1_ref, w2_ref, b2_ref, w3t_ref, b3_ref, o_ref):
    # x_ref : (tm, P*n_in)  -- P logical rows packed per 128-lane physical row.
    # w*_ref: block-diagonal packed weights (VMEM-resident across the grid).
    # o_ref : (P, tm)       -- lane-major: logical row index runs along lanes.
    x = x_ref[...]

    # Layer 1 + LeakyReLU (MXU, f32 accumulation).
    h1 = jnp.dot(x, w1_ref[...], preferred_element_type=jnp.float32) + b1_ref[...]
    h1 = _leaky_relu(h1)

    # Layer 2 + LeakyReLU.
    h2 = jnp.dot(h1, w2_ref[...], preferred_element_type=jnp.float32) + b2_ref[...]
    h2 = _leaky_relu(h2)                                   # (tm, P*8)

    # Layer 3 (8 -> 1), computed transposed so the result lands lane-major:
    #   (P, P*8) . (tm, P*8)^T -> (P, tm)      (full-width stores, no vst.msk)
    yt = jax.lax.dot_general(
        w3t_ref[...], h2,
        dimension_numbers=(((1,), (1,)), ((), ())),
        preferred_element_type=jnp.float32,
    ) + b3_ref[...]                                        # (1,1) bias broadcast

    o_ref[...] = yt.astype(o_ref.dtype)


def _round_up(n, m):
    return ((n + m - 1) // m) * m


def _pack_factor(batch, n_in):
    """Number of logical rows packed into one 128-lane physical row."""
    if n_in >= 128 or 128 % n_in != 0:
        return 1
    p = 128 // n_in
    while p > 1 and batch % p != 0:
        p //= 2
    return p


def _block_diag(block, p):
    """Block-diagonal matrix with `p` copies of `block` on the diagonal."""
    if p == 1:
        return block
    r, c = block.shape
    out = jnp.zeros((p * r, p * c), block.dtype)
    for j in range(p):
        out = out.at[j * r:(j + 1) * r, j * c:(j + 1) * c].set(block)
    return out


def mlp_forward(x, params, *, block_rows=16384):
    """Fused MLP forward. x: (batch, n_inputs) f32 -> (batch, 1) f32.

    block_rows is the batch-tile size in *logical* rows; sweep 8192-32768 in
    production (the default fits comfortably in a 32 MiB scoped-VMEM budget).
    """
    w1, b1, w2, b2, w3, b3 = params
    batch, n_in = x.shape
    h1d, h2d = w1.shape[1], w2.shape[1]

    # ---- Lane-pack the input: P logical rows per physical row (free reshape).
    p = _pack_factor(batch, n_in)
    rows = batch // p
    xp = x.reshape(rows, p * n_in)

    # Block-diagonal packed parameters (tiny, built once per call).
    w1p = _block_diag(w1, p)                    # (P*n_in, P*h1d)
    b1p = jnp.tile(b1, (1, p))                  # (1, P*h1d)
    w2p = _block_diag(w2, p)                    # (P*h1d, P*h2d)
    b2p = jnp.tile(b2, (1, p))                  # (1, P*h2d)
    w3t = _block_diag(w3.reshape(1, h2d), p)    # (P, P*h2d)  transposed layer 3
    b3s = b3.reshape(1, 1)

    # ---- Batch tile (in packed physical rows).  Either a single full-array
    # block (always legal) or a multiple-of-8 tile <= rows with a partial last
    # block handled by Pallas (no wrapper-side padding).
    cap = max(1, block_rows // p)
    if rows <= cap or rows <= 8:
        tm = rows
    else:
        tm = max(8, min((cap // 8) * 8, (rows // 8) * 8))
    num_tiles = pl.cdiv(rows, tm)

    def resident(a):
        # Same block every grid step -> stays resident in VMEM.
        return pl.BlockSpec(a.shape, lambda *_: (0, 0))

    out = pl.pallas_call(
        mlp_kernel,
        out_shape=jax.ShapeDtypeStruct((num_tiles, p, tm), jnp.float32),
        grid=(num_tiles,),
        in_specs=[
            pl.BlockSpec((tm, p * n_in), lambda i: (i, 0)),   # streamed x tiles
            resident(w1p), resident(b1p),
            resident(w2p), resident(b2p),
            resident(w3t), resident(b3s),
        ],
        # Leading grid dim squeezed out; kernel sees a lane-major (P, tm) block.
        out_specs=pl.BlockSpec((None, p, tm), lambda i: (i, 0, 0)),
        compiler_params=pltpu.CompilerParams(
            dimension_semantics=("parallel",),   # dual-TC candidate on v7x
            vmem_limit_bytes=32 * 1024 * 1024,
        ),
    )(xp, w1p, b1p, w2p, b2p, w3t, b3s)

    # Un-interleave (num_tiles, P, tm) -> logical row order; drop the garbage
    # rows of the partial last block.  The output is tiny (batch floats), so
    # this transpose/slice is negligible HBM traffic.
    out = jnp.transpose(out, (0, 2, 1)).reshape(-1, 1)
    return out[:batch]


def mlp_reference(x, params):
    """Pure-JAX reference (matches the PyTorch forward)."""
    w1, b1, w2, b2, w3, b3 = params
    h1 = _leaky_relu(x @ w1 + b1)
    h2 = _leaky_relu(h1 @ w2 + b2)
    return h2 @ w3 + b3


def init_params(key, n_inputs):
    """Deterministic init matching the PyTorch module's shapes.

    Weights: Xavier-uniform (nn.init.xavier_uniform_), stored (in, out).
    Biases:  PyTorch nn.Linear default uniform(-1/sqrt(fan_in), 1/sqrt(fan_in)).
    """
    dims = [(n_inputs, 10), (10, 8), (8, 1)]
    keys = jax.random.split(key, 2 * len(dims))
    params = []
    for i, (fan_in, fan_out) in enumerate(dims):
        kw, kb = keys[2 * i], keys[2 * i + 1]
        bound_w = math.sqrt(6.0 / (fan_in + fan_out))
        w = jax.random.uniform(kw, (fan_in, fan_out), jnp.float32,
                               minval=-bound_w, maxval=bound_w)
        bound_b = 1.0 / math.sqrt(fan_in)
        b = jax.random.uniform(kb, (1, fan_out), jnp.float32,
                               minval=-bound_b, maxval=bound_b)
        params += [w, b]
    return tuple(params)


if __name__ == "__main__":
    n_inputs = 32
    key = jax.random.PRNGKey(0)
    kx, kp = jax.random.split(key)
    params = init_params(kp, n_inputs)

    # Small shapes; the (batch, block_rows) combos exercise: packed P=4 with a
    # multi-step grid + partial block, packed single-block, P=2 fallback,
    # P=1 fallback with a partial block, and a tiny batch.
    configs = [(100, 64), (100, 32768), (50, 64), (45, 16), (7, 32768)]
    for batch, block_rows in configs:
        x = jax.random.normal(kx, (batch, n_inputs), dtype=jnp.float32)
        out = jax.block_until_ready(
            mlp_forward(x, params, block_rows=block_rows))
        ref = mlp_reference(x, params)
        assert out.shape == (batch, 1), (out.shape, batch)
        assert jnp.allclose(out, ref, atol=1e-4, rtol=1e-4), \
            f"mismatch vs reference for batch={batch}, block_rows={block_rows}"

    print("KERNEL_OK")
</pallas_src>

<mosaic_0001>
module attributes {stable_mosaic.version = 11 : i64} {
  func.func @mlp_kernel(%arg0: i32, %arg1: memref<16x128xf32, #tpu.memory_space<vmem>>, %arg2: memref<128x40xf32, #tpu.memory_space<vmem>>, %arg3: memref<1x40xf32, #tpu.memory_space<vmem>>, %arg4: memref<40x32xf32, #tpu.memory_space<vmem>>, %arg5: memref<1x32xf32, #tpu.memory_space<vmem>>, %arg6: memref<4x32xf32, #tpu.memory_space<vmem>>, %arg7: memref<1x1xf32, #tpu.memory_space<vmem>>, %arg8: memref<1x4x16xf32, #tpu.memory_space<vmem>>) attributes {dimension_semantics = [#tpu.dimension_semantics<parallel>], iteration_bounds = array<i64: 2>, scalar_prefetch = 0 : i64, scratch_operands = 0 : i64, tpu.core_type = #tpu.core_type<tc>, window_params = [{transform_indices = @transform_0, window_bounds = array<i64: 16, 128>}, {pipeline_mode = #tpu.pipeline_mode<synchronous>, transform_indices = @transform_1, window_bounds = array<i64: 128, 40>}, {pipeline_mode = #tpu.pipeline_mode<synchronous>, transform_indices = @transform_2, window_bounds = array<i64: 1, 40>}, {pipeline_mode = #tpu.pipeline_mode<synchronous>, transform_indices = @transform_3, window_bounds = array<i64: 40, 32>}, {pipeline_mode = #tpu.pipeline_mode<synchronous>, transform_indices = @transform_4, window_bounds = array<i64: 1, 32>}, {pipeline_mode = #tpu.pipeline_mode<synchronous>, transform_indices = @transform_5, window_bounds = array<i64: 4, 32>}, {pipeline_mode = #tpu.pipeline_mode<synchronous>, transform_indices = @transform_6, window_bounds = array<i64: 1, 1>}, {transform_indices = @transform_7, window_bounds = array<i64: 1, 4, 16>}]} {
    %c0 = arith.constant 0 : index
    %c0_0 = arith.constant 0 : index
    %0 = vector.load %arg1[%c0, %c0_0] : memref<16x128xf32, #tpu.memory_space<vmem>>, vector<16x128xf32>
    %c0_1 = arith.constant 0 : index
    %c0_2 = arith.constant 0 : index
    %1 = vector.load %arg2[%c0_1, %c0_2] : memref<128x40xf32, #tpu.memory_space<vmem>>, vector<128x40xf32>
    %cst = arith.constant dense<0.000000e+00> : vector<16x40xf32>
    %2 = tpu.matmul %0, %1, %cst {dimension_numbers = #tpu.dot_dimension_numbers<[1], [0], [0], [1], [0, 0, 1, 1], [], []>} : vector<16x128xf32>, vector<128x40xf32>, vector<16x40xf32> -> vector<16x40xf32>
    %c0_3 = arith.constant 0 : index
    %c0_4 = arith.constant 0 : index
    %3 = vector.load %arg3[%c0_3, %c0_4] : memref<1x40xf32, #tpu.memory_space<vmem>>, vector<1x40xf32>
    %4 = vector.broadcast %3 : vector<1x40xf32> to vector<16x40xf32>
    %5 = arith.addf %2, %4 : vector<16x40xf32>
    %cst_5 = arith.constant 0.000000e+00 : f32
    %6 = vector.broadcast %cst_5 : f32 to vector<16x40xf32>
    %7 = arith.cmpf ogt, %5, %6 : vector<16x40xf32>
    %cst_6 = arith.constant 0.00999999977 : f32
    %8 = vector.broadcast %cst_6 : f32 to vector<16x40xf32>
    %9 = arith.mulf %8, %5 : vector<16x40xf32>
    %10 = arith.select %7, %5, %9 : vector<16x40xi1>, vector<16x40xf32>
    %c0_7 = arith.constant 0 : index
    %c0_8 = arith.constant 0 : index
    %11 = vector.load %arg4[%c0_7, %c0_8] : memref<40x32xf32, #tpu.memory_space<vmem>>, vector<40x32xf32>
    %cst_9 = arith.constant dense<0.000000e+00> : vector<16x32xf32>
    %12 = tpu.matmul %10, %11, %cst_9 {dimension_numbers = #tpu.dot_dimension_numbers<[1], [0], [0], [1], [0, 0, 1, 1], [], []>} : vector<16x40xf32>, vector<40x32xf32>, vector<16x32xf32> -> vector<16x32xf32>
    %c0_10 = arith.constant 0 : index
    %c0_11 = arith.constant 0 : index
    %13 = vector.load %arg5[%c0_10, %c0_11] : memref<1x32xf32, #tpu.memory_space<vmem>>, vector<1x32xf32>
    %14 = vector.broadcast %13 : vector<1x32xf32> to vector<16x32xf32>
    %15 = arith.addf %12, %14 : vector<16x32xf32>
    %cst_12 = arith.constant 0.000000e+00 : f32
    %16 = vector.broadcast %cst_12 : f32 to vector<16x32xf32>
    %17 = arith.cmpf ogt, %15, %16 : vector<16x32xf32>
    %cst_13 = arith.constant 0.00999999977 : f32
    %18 = vector.broadcast %cst_13 : f32 to vector<16x32xf32>
    %19 = arith.mulf %18, %15 : vector<16x32xf32>
    %20 = arith.select %17, %15, %19 : vector<16x32xi1>, vector<16x32xf32>
    %c0_14 = arith.constant 0 : index
    %c0_15 = arith.constant 0 : index
    %21 = vector.load %arg6[%c0_14, %c0_15] : memref<4x32xf32, #tpu.memory_space<vmem>>, vector<4x32xf32>
    %cst_16 = arith.constant dense<0.000000e+00> : vector<4x16xf32>
    %22 = tpu.matmul %21, %20, %cst_16 {dimension_numbers = #tpu.dot_dimension_numbers<[1], [1], [0], [0], [0, 0, 1, 0], [], []>} : vector<4x32xf32>, vector<16x32xf32>, vector<4x16xf32> -> vector<4x16xf32>
    %c0_17 = arith.constant 0 : index
    %c0_18 = arith.constant 0 : index
    %23 = vector.load %arg7[%c0_17, %c0_18] : memref<1x1xf32, #tpu.memory_space<vmem>>, vector<1x1xf32>
    %24 = vector.broadcast %23 : vector<1x1xf32> to vector<4x16xf32>
    %25 = arith.addf %22, %24 : vector<4x16xf32>
    %c0_19 = arith.constant 0 : index
    %c0_20 = arith.constant 0 : index
    %c0_21 = arith.constant 0 : index
    %26 = vector.load %arg8[%c0_19, %c0_20, %c0_21] : memref<1x4x16xf32, #tpu.memory_space<vmem>>, vector<1x4x16xf32>
    %27 = vector.shape_cast %26 : vector<1x4x16xf32> to vector<4x16xf32>
    %28 = vector.shape_cast %25 : vector<4x16xf32> to vector<1x4x16xf32>
    tpu.vector_store %arg8[%c0_19, %c0_20, %c0_21], %28 {strides = array<i32>} : memref<1x4x16xf32, #tpu.memory_space<vmem>>, vector<1x4x16xf32>,
    return
  }
  func.func @transform_0(%arg0: i32) -> (i32, i32) {
    %c0_i32 = arith.constant 0 : i32
    %c0_i32_0 = arith.constant 0 : i32
    return %arg0, %c0_i32 : i32, i32
  }
  func.func @transform_1(%arg0: i32) -> (i32, i32) {
    %c0_i32 = arith.constant 0 : i32
    %c0_i32_0 = arith.constant 0 : i32
    %c0_i32_1 = arith.constant 0 : i32
    return %c0_i32, %c0_i32_0 : i32, i32
  }
  func.func @transform_2(%arg0: i32) -> (i32, i32) {
    %c0_i32 = arith.constant 0 : i32
    %c0_i32_0 = arith.constant 0 : i32
    %c0_i32_1 = arith.constant 0 : i32
    return %c0_i32, %c0_i32_0 : i32, i32
  }
  func.func @transform_3(%arg0: i32) -> (i32, i32) {
    %c0_i32 = arith.constant 0 : i32
    %c0_i32_0 = arith.constant 0 : i32
    %c0_i32_1 = arith.constant 0 : i32
    return %c0_i32, %c0_i32_0 : i32, i32
  }
  func.func @transform_4(%arg0: i32) -> (i32, i32) {
    %c0_i32 = arith.constant 0 : i32
    %c0_i32_0 = arith.constant 0 : i32
    %c0_i32_1 = arith.constant 0 : i32
    return %c0_i32, %c0_i32_0 : i32, i32
  }
  func.func @transform_5(%arg0: i32) -> (i32, i32) {
    %c0_i32 = arith.constant 0 : i32
    %c0_i32_0 = arith.constant 0 : i32
    %c0_i32_1 = arith.constant 0 : i32
    return %c0_i32, %c0_i32_0 : i32, i32
  }
  func.func @transform_6(%arg0: i32) -> (i32, i32) {
    %c0_i32 = arith.constant 0 : i32
    %c0_i32_0 = arith.constant 0 : i32
    %c0_i32_1 = arith.constant 0 : i32
    return %c0_i32, %c0_i32_0 : i32, i32
  }
  func.func @transform_7(%arg0: i32) -> (i32, i32, i32) {
    %c0_i32 = arith.constant 0 : i32
    %c0_i32_0 = arith.constant 0 : i32
    %c0_i32_1 = arith.constant 0 : i32
    return %arg0, %c0_i32, %c0_i32_0 : i32, i32, i32
  }
}

</mosaic_0001>

<llo_original>
// kernel: tpu_custom_call.1
$region0: #{tpu_custom_call.1}
  #allocation0 [shape = 'u32[]', space=smem, size = 0x4, offset = 0x4, fixed_abs, tag = 'smem constant byte address 0x4 - core index']
  #allocation1 [shape = 'u32[144,128]{1,0:T(1,128)}', space=vmem, size = 0x12000, scoped, tag = 'internal scratch']
  #allocation2 [shape = 'f32[1,1]{1,0:T(1,128)S(1)}', space=vmem, size = 0x200, scoped, tag = 'scoped memory for tpu_custom_call.1']
  %s0 = inlined_call_operand.vmem [shape: f32[25,128], index: 0, kind: input, shape index: {}]
  %s1 = inlined_call_operand.vmem [shape: f32[128,40], index: 1, kind: input, shape index: {}]
  %s2 = inlined_call_operand.vmem [shape: f32[1,40], index: 2, kind: input, shape index: {}]
  %s3 = inlined_call_operand.vmem [shape: f32[40,32], index: 3, kind: input, shape index: {}]
  %s4 = inlined_call_operand.vmem [shape: f32[1,32], index: 4, kind: input, shape index: {}]
  %s5 = inlined_call_operand.vmem [shape: f32[4,32], index: 5, kind: input, shape index: {}]
  %s6 = inlined_call_operand.<no memory space> [shape: f32[1,1], index: 6, kind: input, shape index: {}]
  %s7 = inlined_call_operand.hbm [shape: f32[2,4,16], index: 7, kind: output, shape index: {}]
  %s8 = sld [smem:[#allocation0]]
  $region61: #{tpu_custom_call.1} parent=0
    _
  %s10 = ssub.s32 1, %s8
  %s11 = scalar_select 0, %s10, %s8
  %v12 = vstv %s6
  %13 = vst [vmem:[#allocation2] sm:$0x1] %v12
  $region1: #{tpu_custom_call.1} parent=0
    #allocation3 [shape = 'u8[4096]{0}', space=vmem, size = 0x1000, scoped, tag = 'output window, operand 0']
    #allocation4 [shape = 's32[2]{0}', space=sflag, size = 0x8, scoped, tag = 'scoped memory for tpu_custom_call.1']
    %14 = vsyncpa [#allocation4], 0
    %s15 = scalar_lea.sflag [#allocation4], 1
    %16 = vsyncpa %s15, 0
    loop: start=0, step=1, limit=4
    $region2: #{tpu_custom_call.1} parent=1 // loop_pre_header
      _
    $region3: #{tpu_custom_call.1} parent=1 // loop_header
      %s18 = sphi 0, %s22
      %p19 = scmp.ge.s32.totalorder %s18, 4
      %s28 = sphi 0, %s30
      %s31 = sphi 0, %s28
      %s32 = sphi 0, %s31
      %s48 = sphi 0, %s32
      %s52 = sphi 0, %s52
      %s54 = sphi 0, %s52
      %s55 = sphi 0, %s54
      %s69 = sphi 0, %s55
      %s73 = sphi 0, %s73
      %s75 = sphi 0, %s73
      %s76 = sphi 0, %s75
      %s90 = sphi 0, %s76
      %s94 = sphi 0, %s94
      %s96 = sphi 0, %s94
      %s97 = sphi 0, %s96
      %s111 = sphi 0, %s97
      %s115 = sphi 0, %s115
      %s117 = sphi 0, %s115
      %s118 = sphi 0, %s117
      %s132 = sphi 0, %s118
      %s136 = sphi 0, %s136
      %s138 = sphi 0, %s136
      %s139 = sphi 0, %s138
      %s153 = sphi 0, %s139
      %s157 = sphi 0, %s157
      %s159 = sphi 0, %s157
      %s160 = sphi 0, %s159
      %s174 = sphi 0, %s160
      %s180 = sphi 0, %s182
      %s183 = sphi 0, %s180
      %s184 = sphi 0, %s183
      %s200 = sphi 0, %s184
    $region4: #{tpu_custom_call.1} parent=1 // loop_header_branch
      %21 = sbr.rel (%p19) target = $region8
    $region5: #{tpu_custom_call.1} parent=1 // loop_body
      %s23 = ssub.s32 %s18, 1
      %s24 = ssub.s32 %s18, 2
      %s25 = sadd.s32 %s18, 1
      %s26 = ssub.s32 %s18, %s25
      %p27 = scmp.eq.s32.totalorder %s26, 0
      %s29 = sadd.s32 %s28, 1
      %s30 = scalar_select %p27, %s28, %s29
      %p33 = pneg %p27
      %p34 = scmp.eq.s32.totalorder %s18, 1
      %p35 = por %p33, %p34
      %p36 = scmp.ne.s32.totalorder %s28, %s31
      %p37 = scmp.eq.s32.totalorder %s18, 0
      %p38 = por %p36, %p37
      %p39 = scmp.ne.s32.totalorder %s28, %s31
      %p40 = scmp.eq.s32.totalorder %s23, 1
      %p41 = por %p39, %p40
      %p42 = scmp.ne.s32.totalorder %s31, %s32
      %p43 = scmp.eq.s32.totalorder %s23, 0
      %p44 = por %p42, %p43
      %p45 = scmp.ne.s32.totalorder %s31, %s32
      %p46 = scmp.eq.s32.totalorder %s24, 1
      %p47 = por %p45, %p46
      %p49 = scmp.ne.s32.totalorder %s32, %s48
      %p50 = scmp.eq.s32.totalorder %s24, 0
      %p51 = por %p49, %p50
      %s53 = sadd.s32 %s52, 1
      %p56 = scmp.eq.s32.totalorder %s18, 1
      %p57 = scmp.ne.s32.totalorder %s52, %s54
      %p58 = scmp.eq.s32.totalorder %s18, 0
      %p59 = por %p57, %p58
      %p60 = scmp.ne.s32.totalorder %s52, %s54
      %p61 = scmp.eq.s32.totalorder %s23, 1
      %p62 = por %p60, %p61
      %p63 = scmp.ne.s32.totalorder %s54, %s55
      %p64 = scmp.eq.s32.totalorder %s23, 0
      %p65 = por %p63, %p64
      %p66 = scmp.ne.s32.totalorder %s54, %s55
      %p67 = scmp.eq.s32.totalorder %s24, 1
      %p68 = por %p66, %p67
      %p70 = scmp.ne.s32.totalorder %s55, %s69
      %p71 = scmp.eq.s32.totalorder %s24, 0
      %p72 = por %p70, %p71
      %s74 = sadd.s32 %s73, 1
      %p77 = scmp.eq.s32.totalorder %s18, 1
      %p78 = scmp.ne.s32.totalorder %s73, %s75
      %p79 = scmp.eq.s32.totalorder %s18, 0
      %p80 = por %p78, %p79
      %p81 = scmp.ne.s32.totalorder %s73, %s75
      %p82 = scmp.eq.s32.totalorder %s23, 1
      %p83 = por %p81, %p82
      %p84 = scmp.ne.s32.totalorder %s75, %s76
      %p85 = scmp.eq.s32.totalorder %s23, 0
      %p86 = por %p84, %p85
      %p87 = scmp.ne.s32.totalorder %s75, %s76
      %p88 = scmp.eq.s32.totalorder %s24, 1
      %p89 = por %p87, %p88
      %p91 = scmp.ne.s32.totalorder %s76, %s90
      %p92 = scmp.eq.s32.totalorder %s24, 0
      %p93 = por %p91, %p92
      %s95 = sadd.s32 %s94, 1
      %p98 = scmp.eq.s32.totalorder %s18, 1
      %p99 = scmp.ne.s32.totalorder %s94, %s96
      %p100 = scmp.eq.s32.totalorder %s18, 0
      %p101 = por %p99, %p100
      %p102 = scmp.ne.s32.totalorder %s94, %s96
      %p103 = scmp.eq.s32.totalorder %s23, 1
      %p104 = por %p102, %p103
      %p105 = scmp.ne.s32.totalorder %s96, %s97
      %p106 = scmp.eq.s32.totalorder %s23, 0
      %p107 = por %p105, %p106
      %p108 = scmp.ne.s32.totalorder %s96, %s97
      %p109 = scmp.eq.s32.totalorder %s24, 1
      %p110 = por %p108, %p109
      %p112 = scmp.ne.s32.totalorder %s97, %s111
      %p113 = scmp.eq.s32.totalorder %s24, 0
      %p114 = por %p112, %p113
      %s116 = sadd.s32 %s115, 1
      %p119 = scmp.eq.s32.totalorder %s18, 1
      %p120 = scmp.ne.s32.totalorder %s115, %s117
      %p121 = scmp.eq.s32.totalorder %s18, 0
      %p122 = por %p120, %p121
      %p123 = scmp.ne.s32.totalorder %s115, %s117
      %p124 = scmp.eq.s32.totalorder %s23, 1
      %p125 = por %p123, %p124
      %p126 = scmp.ne.s32.totalorder %s117, %s118
      %p127 = scmp.eq.s32.totalorder %s23, 0
      %p128 = por %p126, %p127
      %p129 = scmp.ne.s32.totalorder %s117, %s118
      %p130 = scmp.eq.s32.totalorder %s24, 1
      %p131 = por %p129, %p130
      %p133 = scmp.ne.s32.totalorder %s118, %s132
      %p134 = scmp.eq.s32.totalorder %s24, 0
      %p135 = por %p133, %p134
      %s137 = sadd.s32 %s136, 1
      %p140 = scmp.eq.s32.totalorder %s18, 1
      %p141 = scmp.ne.s32.totalorder %s136, %s138
      %p142 = scmp.eq.s32.totalorder %s18, 0
      %p143 = por %p141, %p142
      %p144 = scmp.ne.s32.totalorder %s136, %s138
      %p145 = scmp.eq.s32.totalorder %s23, 1
      %p146 = por %p144, %p145
      %p147 = scmp.ne.s32.totalorder %s138, %s139
      %p148 = scmp.eq.s32.totalorder %s23, 0
      %p149 = por %p147, %p148
      %p150 = scmp.ne.s32.totalorder %s138, %s139
      %p151 = scmp.eq.s32.totalorder %s24, 1
      %p152 = por %p150, %p151
      %p154 = scmp.ne.s32.totalorder %s139, %s153
      %p155 = scmp.eq.s32.totalorder %s24, 0
      %p156 = por %p154, %p155
      %s158 = sadd.s32 %s157, 1
      %p161 = scmp.eq.s32.totalorder %s18, 1
      %p162 = scmp.ne.s32.totalorder %s157, %s159
      %p163 = scmp.eq.s32.totalorder %s18, 0
      %p164 = por %p162, %p163
      %p165 = scmp.ne.s32.totalorder %s157, %s159
      %p166 = scmp.eq.s32.totalorder %s23, 1
      %p167 = por %p165, %p166
      %p168 = scmp.ne.s32.totalorder %s159, %s160
      %p169 = scmp.eq.s32.totalorder %s23, 0
      %p170 = por %p168, %p169
      %p171 = scmp.ne.s32.totalorder %s159, %s160
      %p172 = scmp.eq.s32.totalorder %s24, 1
      %p173 = por %p171, %p172
      %p175 = scmp.ne.s32.totalorder %s160, %s174
      %p176 = scmp.eq.s32.totalorder %s24, 0
      %p177 = por %p175, %p176
      %s178 = ssub.s32 %s18, %s25
      %p179 = scmp.eq.s32.totalorder %s178, 0
      %s181 = sadd.s32 %s180, 1
      %s182 = scalar_select %p179, %s180, %s181
      %p185 = pneg %p179
      %p186 = scmp.eq.s32.totalorder %s18, 1
      %p187 = por %p185, %p186
      %p188 = scmp.ne.s32.totalorder %s180, %s183
      %p189 = scmp.eq.s32.totalorder %s18, 0
      %p190 = por %p188, %p189
      %p191 = scmp.ne.s32.totalorder %s180, %s183
      %p192 = scmp.eq.s32.totalorder %s23, 1
      %p193 = por %p191, %p192
      %p194 = scmp.ne.s32.totalorder %s183, %s184
      %p195 = scmp.eq.s32.totalorder %s23, 0
      %p196 = por %p194, %p195
      %p197 = scmp.ne.s32.totalorder %s183, %s184
      %p198 = scmp.eq.s32.totalorder %s24, 1
      %p199 = por %p197, %p198
      %p201 = scmp.ne.s32.totalorder %s184, %s200
      %p202 = scmp.eq.s32.totalorder %s24, 0
      %p203 = por %p201, %p202
      %p204 = scmp.le.s32.totalorder 1, %s18
      %p205 = scmp.lt.s32.totalorder %s18, 3
      %p206 = pnand %p204, %p205
      %p207 = pneg %p206
      // Predicated region
      $region9: #{tpu_custom_call.1} parent=5 // pred_check
        _
      $region10: #{tpu_custom_call.1} parent=5 // pred_check_branch
        %209 = sbr.rel (%p206) target = $region12
      $region11: #{tpu_custom_call.1} parent=5 // pred_region
        %s210 = ssub.s32 %s18, 1
        // Predicated region
        $region13: #{tpu_custom_call.1} parent=11 // pred_check
          %p211 = pneg %p65
        $region14: #{tpu_custom_call.1} parent=11 // pred_check_branch
          %213 = sbr.rel (%p211) target = $region16
        $region15: #{tpu_custom_call.1} parent=11 // pred_region
          _
        $region16: #{tpu_custom_call.1} parent=11 // pred_fallthru
          _
        // Predicated region
        $region17: #{tpu_custom_call.1} parent=11 // pred_check
          %p214 = pneg %p86
        $region18: #{tpu_custom_call.1} parent=11 // pred_check_branch
          %216 = sbr.rel (%p214) target = $region20
        $region19: #{tpu_custom_call.1} parent=11 // pred_region
          _
        $region20: #{tpu_custom_call.1} parent=11 // pred_fallthru
          _
        // Predicated region
        $region21: #{tpu_custom_call.1} parent=11 // pred_check
          %p217 = pneg %p107
        $region22: #{tpu_custom_call.1} parent=11 // pred_check_branch
          %219 = sbr.rel (%p217) target = $region24
        $region23: #{tpu_custom_call.1} parent=11 // pred_region
          _
        $region24: #{tpu_custom_call.1} parent=11 // pred_fallthru
          _
        // Predicated region
        $region25: #{tpu_custom_call.1} parent=11 // pred_check
          %p220 = pneg %p128
        $region26: #{tpu_custom_call.1} parent=11 // pred_check_branch
          %222 = sbr.rel (%p220) target = $region28
        $region27: #{tpu_custom_call.1} parent=11 // pred_region
          _
        $region28: #{tpu_custom_call.1} parent=11 // pred_fallthru
          _
        // Predicated region
        $region29: #{tpu_custom_call.1} parent=11 // pred_check
          %p223 = pneg %p149
        $region30: #{tpu_custom_call.1} parent=11 // pred_check_branch
          %225 = sbr.rel (%p223) target = $region32
        $region31: #{tpu_custom_call.1} parent=11 // pred_region
          _
        $region32: #{tpu_custom_call.1} parent=11 // pred_fallthru
          _
        // Predicated region
        $region33: #{tpu_custom_call.1} parent=11 // pred_check
          %p226 = pneg %p170
        $region34: #{tpu_custom_call.1} parent=11 // pred_check_branch
          %228 = sbr.rel (%p226) target = $region36
        $region35: #{tpu_custom_call.1} parent=11 // pred_region
          _
        $region36: #{tpu_custom_call.1} parent=11 // pred_fallthru
          _
      $region12: #{tpu_custom_call.1} parent=5 // pred_fallthru
        _
      %p229 = scmp.lt.s32.totalorder %s18, 2
      // Predicated region
      $region37: #{tpu_custom_call.1} parent=5 // pred_check
        %p230 = pneg %p229
      $region38: #{tpu_custom_call.1} parent=5 // pred_check_branch
        %232 = sbr.rel (%p230) target = $region40
      $region39: #{tpu_custom_call.1} parent=5 // pred_region
        // Predicated region
        $region41: #{tpu_custom_call.1} parent=39 // pred_check
          %p233 = pneg %p38
        $region42: #{tpu_custom_call.1} parent=39 // pred_check_branch
          %235 = sbr.rel (%p233) target = $region44
        $region43: #{tpu_custom_call.1} parent=39 // pred_region
          %s236 = smul.u32 2, %s18
          %p237 = scmp.lt.s32.totalorder %s236, 3
          %s238 = scalar_select %p237, %s236, 3
          %s239 = smul.addr %s238, 8
          %s240 = scalar_lea.vmem %s0, %s239
          %s241 = smul.u32 2, %s18
        $region44: #{tpu_custom_call.1} parent=39 // pred_fallthru
          _
      $region40: #{tpu_custom_call.1} parent=5 // pred_fallthru
        _
      %p242 = scmp.le.s32.totalorder 1, %s18
      %p243 = scmp.lt.s32.totalorder %s18, 3
      %p244 = pnand %p242, %p243
      %p245 = pneg %p244
      // Predicated region
      $region45: #{tpu_custom_call.1} parent=5 // pred_check
        _
      $region46: #{tpu_custom_call.1} parent=5 // pred_check_branch
        %247 = sbr.rel (%p244) target = $region48
      $region47: #{tpu_custom_call.1} parent=5 // pred_region
        %s248 = ssub.s32 %s18, 1
        %s249 = smul.u32 2, %s23
        %p250 = scmp.lt.s32.totalorder %s249, 3
        %s251 = scalar_select %p250, %s249, 3
        %s252 = smul.addr %s251, 8
        %s253 = scalar_lea.vmem %s0, %s252
        %p254 = pneg %p44
        %p255 = pneg %p41
        %p256 = pneg %p65
        %p257 = pneg %p62
        %p258 = pneg %p86
        %p259 = pneg %p83
        %p260 = pneg %p107
        %p261 = pneg %p104
        %p262 = pneg %p128
        %p263 = pneg %p125
        %p264 = pneg %p149
        %p265 = pneg %p146
        %p266 = pneg %p170
        %p267 = pneg %p167
        %p268 = pneg %p196
        %p269 = pneg %p193
        %s270 = sand.u32 %s183, 1
        %s271 = scalar_lea.sflag [#allocation4], %s270
        %s272 = sand.u32 %s183, 1
        %s273 = smul.addr %s272, 4
        %s274 = scalar_lea.vmem [#allocation3], %s273
        %s275 = smul.u32 2, %s23
        %p276 = scmp.lt.s32.totalorder %s275, 3
        %s277 = scalar_select %p276, %s275, 3
        %s278 = smul.addr %s277, 8
        %s279 = scalar_lea.vmem %s0, %s278
        %s280 = smul.u32 2, %s23
        %v281 = vld [vmem:[%s279] sm:$0xff]
        %v282 = vld [vmem:[%s279 + $0x8] sm:$0xff]
        %v283 = vld [vmem:[%s1] sm:$0xff]
        %v284 = vld [vmem:[%s1 + $0x8] sm:$0xff]
        %v285 = vld [vmem:[%s1 + $0x10] sm:$0xff]
        %v286 = vld [vmem:[%s1 + $0x18] sm:$0xff]
        %v287 = vld [vmem:[%s1 + $0x20] sm:$0xff]
        %v288 = vld [vmem:[%s1 + $0x28] sm:$0xff]
        %v289 = vld [vmem:[%s1 + $0x30] sm:$0xff]
        %v290 = vld [vmem:[%s1 + $0x38] sm:$0xff]
        %v291 = vld [vmem:[%s1 + $0x40] sm:$0xff]
        %v292 = vld [vmem:[%s1 + $0x48] sm:$0xff]
        %v293 = vld [vmem:[%s1 + $0x50] sm:$0xff]
        %v294 = vld [vmem:[%s1 + $0x58] sm:$0xff]
        %v295 = vld [vmem:[%s1 + $0x60] sm:$0xff]
        %v296 = vld [vmem:[%s1 + $0x68] sm:$0xff]
        %v297 = vld [vmem:[%s1 + $0x70] sm:$0xff]
        %v298 = vld [vmem:[%s1 + $0x78] sm:$0xff]
        %v299 = vld [vmem:[%s2] sm:$0x1]
        %v301 = vlaneseq
        %v302 = vshrl.u32 %v301, 7
        %v303 = vsub.s32 0, %v302
        %v304 = vrot.slane %v299, %v303
        %306 = vmatprep.subr.mxu0 0.0
        %307 = vmatpush1.msra.mxu0 %v298
        %308 = vmatprep.subr.mxu0 0.0
        %309 = vmatpush1.msra.mxu0 %v297
        %310 = vmatprep.subr.mxu0 0.0
        %311 = vmatpush1.msra.mxu0 %v296
        %312 = vmatprep.subr.mxu0 0.0
        %313 = vmatpush1.msra.mxu0 %v295
        %314 = vmatprep.subr.mxu0 0.0
        %315 = vmatpush1.msra.mxu0 %v294
        %316 = vmatprep.subr.mxu0 0.0
        %317 = vmatpush1.msra.mxu0 %v293
        %318 = vmatprep.subr.mxu0 0.0
        %319 = vmatpush1.msra.mxu0 %v292
        %320 = vmatprep.subr.mxu0 0.0
        %321 = vmatpush1.msra.mxu0 %v291
        %322 = vmatprep.subr.mxu0 0.0
        %323 = vmatpush1.msra.mxu0 %v290
        %324 = vmatprep.subr.mxu0 0.0
        %325 = vmatpush1.msra.mxu0 %v289
        %326 = vmatprep.subr.mxu0 0.0
        %327 = vmatpush1.msra.mxu0 %v288
        %328 = vmatprep.subr.mxu0 0.0
        %329 = vmatpush1.msra.mxu0 %v287
        %330 = vmatprep.subr.mxu0 0.0
        %331 = vmatpush1.msra.mxu0 %v286
        %332 = vmatprep.subr.mxu0 0.0
        %333 = vmatpush1.msra.mxu0 %v285
        %334 = vmatprep.subr.mxu0 0.0
        %335 = vmatpush1.msra.mxu0 %v284
        %336 = vmatprep.subr.mxu0 0.0
        %337 = vmatpush1.msra.mxu0 %v283
        %338 = vmatprep.subr.mxu0 0.0
        %339 = vmatpush2.msra.mxu0 0.0
        %340 = vmatprep.subr.mxu0 0.0
        %341 = vmatpush2.msra.mxu0 0.0
        %342 = vmatprep.subr.mxu0 0.0
        %343 = vmatpush2.msra.mxu0 0.0
        %344 = vmatprep.subr.mxu0 0.0
        %345 = vmatpush2.msra.mxu0 0.0
        %346 = vmatprep.subr.mxu0 0.0
        %347 = vmatpush2.msra.mxu0 0.0
        %348 = vmatprep.subr.mxu0 0.0
        %349 = vmatpush2.msra.mxu0 0.0
        %350 = vmatprep.subr.mxu0 0.0
        %351 = vmatpush2.msra.mxu0 0.0
        %352 = vmatprep.subr.mxu0 0.0
        %353 = vmatpush2.msra.mxu0 0.0
        %354 = vmatprep.subr.mxu0 0.0
        %355 = vmatpush2.msra.mxu0 0.0
        %356 = vmatprep.subr.mxu0 0.0
        %357 = vmatpush2.msra.mxu0 0.0
        %358 = vmatprep.subr.mxu0 0.0
        %359 = vmatpush2.msra.mxu0 0.0
        %360 = vmatprep.subr.mxu0 0.0
        %361 = vmatpush2.msra.mxu0 0.0
        %362 = vmatprep.subr.mxu0 0.0
        %363 = vmatpush2.msra.mxu0 0.0
        %364 = vmatprep.subr.mxu0 0.0
        %365 = vmatpush2.msra.mxu0 0.0
        %366 = vmatprep.subr.mxu0 0.0
        %367 = vmatpush2.msra.mxu0 0.0
        %368 = vmatprep.subr.mxu0 0.0
        %369 = vmatpush2.msra.mxu0 0.0
        %370 = vmatprep.mubr.f32.mxu0 0.0
        %371 = vmatmul.mubr.f32.gmra.mxu0 %v281
        %v372 = vpop.f32.mrf.mxu0
        %v373 = vadd.f32 %v304, %v372
        %v374 = vpop.f32.mrf.mxu0
        %375 = vmatprep.mubr.f32.mxu0 0.0
        %376 = vmatmul.mubr.f32.gmra.mxu0 %v282
        %v377 = vpop.f32.mrf.mxu0
        %v378 = vadd.f32 %v304, %v377
        %v379 = vpop.f32.mrf.mxu0
        %380 = vdwg.mxu0
        %vm381 = vcmp.gt.f32.partialorder %v373, 0.0
        %vm382 = vcmp.gt.f32.partialorder %v378, 0.0
        %v383 = vmul.f32 %v373, 0.01
        %v384 = vmul.f32 %v378, 0.01
        %v385 = vsel %vm381, %v373, %v383
        %v386 = vsel %vm382, %v378, %v384
        %v387 = vld [vmem:[%s3] sm:$0xff]
        %v388 = vld [vmem:[%s3 + $0x8] sm:$0xff]
        %v389 = vld [vmem:[%s3 + $0x10] sm:$0xff]
        %v390 = vld [vmem:[%s3 + $0x18] sm:$0xff]
        %v391 = vld [vmem:[%s3 + $0x20] sm:$0xff]
        %v392 = vld [vmem:[%s4] sm:$0x1]
        %v394 = vlaneseq
        %v395 = vshrl.u32 %v394, 7
        %v396 = vsub.s32 0, %v395
        %v397 = vrot.slane %v392, %v396
        %vm399 = vcmask 326656
        %v401 = vsel %vm399, %v385, 0
        %v404 = vsel %vm399, %v386, 0
        %406 = vmatprep.subr.mxu0 0.0
        %407 = vmatpush1.msra.mxu0 0.0
        %408 = vmatprep.subr.mxu0 0.0
        %409 = vmatpush1.msra.mxu0 0.0
        %410 = vmatprep.subr.mxu0 0.0
        %411 = vmatpush1.msra.mxu0 0.0
        %412 = vmatprep.subr.mxu0 0.0
        %413 = vmatpush1.msra.mxu0 0.0
        %414 = vmatprep.subr.mxu0 0.0
        %415 = vmatpush1.msra.mxu0 0.0
        %416 = vmatprep.subr.mxu0 0.0
        %417 = vmatpush1.msra.mxu0 0.0
        %418 = vmatprep.subr.mxu0 0.0
        %419 = vmatpush1.msra.mxu0 0.0
        %420 = vmatprep.subr.mxu0 0.0
        %421 = vmatpush1.msra.mxu0 0.0
        %422 = vmatprep.subr.mxu0 0.0
        %423 = vmatpush1.msra.mxu0 0.0
        %424 = vmatprep.subr.mxu0 0.0
        %425 = vmatpush1.msra.mxu0 0.0
        %426 = vmatprep.subr.mxu0 0.0
        %427 = vmatpush1.msra.mxu0 0.0
        %428 = vmatprep.subr.mxu0 0.0
        %429 = vmatpush1.msra.mxu0 %v391
        %430 = vmatprep.subr.mxu0 0.0
        %431 = vmatpush1.msra.mxu0 %v390
        %432 = vmatprep.subr.mxu0 0.0
        %433 = vmatpush1.msra.mxu0 %v389
        %434 = vmatprep.subr.mxu0 0.0
        %435 = vmatpush1.msra.mxu0 %v388
        %436 = vmatprep.subr.mxu0 0.0
        %437 = vmatpush1.msra.mxu0 %v387
        %438 = vmatprep.subr.mxu0 0.0
        %439 = vmatpush2.msra.mxu0 0.0
        %440 = vmatprep.subr.mxu0 0.0
        %441 = vmatpush2.msra.mxu0 0.0
        %442 = vmatprep.subr.mxu0 0.0
        %443 = vmatpush2.msra.mxu0 0.0
        %444 = vmatprep.subr.mxu0 0.0
        %445 = vmatpush2.msra.mxu0 0.0
        %446 = vmatprep.subr.mxu0 0.0
        %447 = vmatpush2.msra.mxu0 0.0
        %448 = vmatprep.subr.mxu0 0.0
        %449 = vmatpush2.msra.mxu0 0.0
        %450 = vmatprep.subr.mxu0 0.0
        %451 = vmatpush2.msra.mxu0 0.0
        %452 = vmatprep.subr.mxu0 0.0
        %453 = vmatpush2.msra.mxu0 0.0
        %454 = vmatprep.subr.mxu0 0.0
        %455 = vmatpush2.msra.mxu0 0.0
        %456 = vmatprep.subr.mxu0 0.0
        %457 = vmatpush2.msra.mxu0 0.0
        %458 = vmatprep.subr.mxu0 0.0
        %459 = vmatpush2.msra.mxu0 0.0
        %460 = vmatprep.subr.mxu0 0.0
        %461 = vmatpush2.msra.mxu0 0.0
        %462 = vmatprep.subr.mxu0 0.0
        %463 = vmatpush2.msra.mxu0 0.0
        %464 = vmatprep.subr.mxu0 0.0
        %465 = vmatpush2.msra.mxu0 0.0
        %466 = vmatprep.subr.mxu0 0.0
        %467 = vmatpush2.msra.mxu0 0.0
        %468 = vmatprep.subr.mxu0 0.0
        %469 = vmatpush2.msra.mxu0 0.0
        %470 = vmatprep.mubr.f32.mxu0 0.0
        %471 = vmatmul.mubr.f32.gmra.mxu0 %v401
        %v472 = vpop.f32.mrf.mxu0
        %v473 = vadd.f32 %v397, %v472
        %v474 = vpop.f32.mrf.mxu0
        %475 = vmatprep.mubr.f32.mxu0 0.0
        %476 = vmatmul.mubr.f32.gmra.mxu0 %v404
        %v477 = vpop.f32.mrf.mxu0
        %v478 = vadd.f32 %v397, %v477
        %v479 = vpop.f32.mrf.mxu0
        %480 = vdwg.mxu0
        %vm481 = vcmp.gt.f32.partialorder %v473, 0.0
        %vm482 = vcmp.gt.f32.partialorder %v478, 0.0
        %v483 = vmul.f32 %v473, 0.01
        %v484 = vmul.f32 %v478, 0.01
        %v485 = vsel %vm481, %v473, %v483
        %v486 = vsel %vm482, %v478, %v484
        %v487 = vld [vmem:[%s5] sm:$0xf]
        %v488 = vld [vmem:[#allocation2] sm:$0x1]
        %v490 = vlaneseq
        %v491 = vshrl.u32 %v490, 7
        %v492 = vsub.s32 0, %v491
        %v493 = vrot.slane %v488, %v492
        %494 = vset.pattern.permute.xlu0 0
        %495 = vperm.xlu0 %494, %v493
        %v496 = vpop.permute.xlu0 %495
        %vm498 = vcmask 261120
        %v500 = vsel %vm498, %v487, 0
        %v503 = vsel %vm498, %v485, 0
        %v506 = vsel %vm498, %v486, 0
        %508 = vmatprep.subr.mxu0 0.0
        %509 = vmatpush1.xpose.msra.mxu0 0.0
        %510 = vmatprep.subr.mxu0 0.0
        %511 = vmatpush1.xpose.msra.mxu0 0.0
        %512 = vmatprep.subr.mxu0 0.0
        %513 = vmatpush1.xpose.msra.mxu0 0.0
        %514 = vmatprep.subr.mxu0 0.0
        %515 = vmatpush1.xpose.msra.mxu0 0.0
        %516 = vmatprep.subr.mxu0 0.0
        %517 = vmatpush1.xpose.msra.mxu0 0.0
        %518 = vmatprep.subr.mxu0 0.0
        %519 = vmatpush1.xpose.msra.mxu0 0.0
        %520 = vmatprep.subr.mxu0 0.0
        %521 = vmatpush1.xpose.msra.mxu0 0.0
        %522 = vmatprep.subr.mxu0 0.0
        %523 = vmatpush1.xpose.msra.mxu0 0.0
        %524 = vmatprep.subr.mxu0 0.0
        %525 = vmatpush1.xpose.msra.mxu0 0.0
        %526 = vmatprep.subr.mxu0 0.0
        %527 = vmatpush1.xpose.msra.mxu0 0.0
        %528 = vmatprep.subr.mxu0 0.0
        %529 = vmatpush1.xpose.msra.mxu0 0.0
        %530 = vmatprep.subr.mxu0 0.0
        %531 = vmatpush1.xpose.msra.mxu0 0.0
        %532 = vmatprep.subr.mxu0 0.0
        %533 = vmatpush1.xpose.msra.mxu0 0.0
        %534 = vmatprep.subr.mxu0 0.0
        %535 = vmatpush1.xpose.msra.mxu0 0.0
        %536 = vmatprep.subr.mxu0 0.0
        %537 = vmatpush1.xpose.msra.mxu0 %v506
        %538 = vmatprep.subr.mxu0 0.0
        %539 = vmatpush1.xpose.msra.mxu0 %v503
        %540 = vmatprep.subr.mxu0 0.0
        %541 = vmatpush2.xpose.msra.mxu0 0.0
        %542 = vmatprep.subr.mxu0 0.0
        %543 = vmatpush2.xpose.msra.mxu0 0.0
        %544 = vmatprep.subr.mxu0 0.0
        %545 = vmatpush2.xpose.msra.mxu0 0.0
        %546 = vmatprep.subr.mxu0 0.0
        %547 = vmatpush2.xpose.msra.mxu0 0.0
        %548 = vmatprep.subr.mxu0 0.0
        %549 = vmatpush2.xpose.msra.mxu0 0.0
        %550 = vmatprep.subr.mxu0 0.0
        %551 = vmatpush2.xpose.msra.mxu0 0.0
        %552 = vmatprep.subr.mxu0 0.0
        %553 = vmatpush2.xpose.msra.mxu0 0.0
        %554 = vmatprep.subr.mxu0 0.0
        %555 = vmatpush2.xpose.msra.mxu0 0.0
        %556 = vmatprep.subr.mxu0 0.0
        %557 = vmatpush2.xpose.msra.mxu0 0.0
        %558 = vmatprep.subr.mxu0 0.0
        %559 = vmatpush2.xpose.msra.mxu0 0.0
        %560 = vmatprep.subr.mxu0 0.0
        %561 = vmatpush2.xpose.msra.mxu0 0.0
        %562 = vmatprep.subr.mxu0 0.0
        %563 = vmatpush2.xpose.msra.mxu0 0.0
        %564 = vmatprep.subr.mxu0 0.0
        %565 = vmatpush2.xpose.msra.mxu0 0.0
        %566 = vmatprep.subr.mxu0 0.0
        %567 = vmatpush2.xpose.msra.mxu0 0.0
        %568 = vmatprep.subr.mxu0 0.0
        %569 = vmatpush2.xpose.msra.mxu0 0.0
        %570 = vmatprep.subr.mxu0 0.0
        %571 = vmatpush2.xpose.msra.mxu0 0.0
        %572 = vmatprep.mubr.f32.mxu0 0.0
        %573 = vmatmul.mubr.f32.gmra.mxu0 %v500
        %v574 = vpop.f32.mrf.mxu0
        %v575 = vadd.f32 %v496, %v574
        %v576 = vpop.f32.mrf.mxu0
        %577 = vdwg.mxu0
        %vm578 = vcmask 125952
        %579 = vst.msk [vmem:[%s274] sm:$0xf] %vm578, %v575
        %s580 = sand.u32 %s183, 1
        %s581 = scalar_lea.sflag [#allocation4], %s580
        %s582 = sand.u32 %s183, 1
        %s583 = smul.addr %s582, 4
        %s584 = scalar_lea.vmem [#allocation3], %s583
        // Predicated region
        $region49: #{tpu_custom_call.1} parent=47 // pred_check
          %p585 = pneg %p193
        $region50: #{tpu_custom_call.1} parent=47 // pred_check_branch
          %587 = sbr.rel (%p585) target = $region52
        $region51: #{tpu_custom_call.1} parent=47 // pred_region
          %s589 = ssub.s32 64, 64
          %590 = vsyncadd %s581, %s589
          %s591 = smul.addr %s23, 64
          %s592 = scalar_lea.hbm %s7, %s591
          %s594 = sshll.u32 %s584, 4
          %s595 = int_to_ptr.vmem [resolvable:$true] %s594
          %597 = dma.vmem_to_hbm [thread:$0]  %s595, 64, %s592, %s581
        $region52: #{tpu_custom_call.1} parent=47 // pred_fallthru
          _
      $region48: #{tpu_custom_call.1} parent=5 // pred_fallthru
        _
      %p598 = scmp.le.s32.totalorder 2, %s18
      // Predicated region
      $region53: #{tpu_custom_call.1} parent=5 // pred_check
        %p599 = pneg %p598
      $region54: #{tpu_custom_call.1} parent=5 // pred_check_branch
        %601 = sbr.rel (%p599) target = $region56
      $region55: #{tpu_custom_call.1} parent=5 // pred_region
        %s602 = ssub.s32 %s18, 2
        // Predicated region
        $region57: #{tpu_custom_call.1} parent=55 // pred_check
          %p603 = pneg %p199
        $region58: #{tpu_custom_call.1} parent=55 // pred_check_branch
          %605 = sbr.rel (%p603) target = $region60
        $region59: #{tpu_custom_call.1} parent=55 // pred_region
          %s606 = sand.u32 %s184, 1
          %s607 = scalar_lea.sflag [#allocation4], %s606
          %s608 = sand.u32 %s184, 1
          %s609 = smul.addr %s608, 4
          %s610 = scalar_lea.vmem [#allocation3], %s609
          %611 = dma.done %s607, 64
        $region60: #{tpu_custom_call.1} parent=55 // pred_fallthru
          _
      $region56: #{tpu_custom_call.1} parent=5 // pred_fallthru
        _
    $region6: #{tpu_custom_call.1} parent=1 // loop_footer
      %s22 = sadd.s32 1, %s18
    $region7: #{tpu_custom_call.1} parent=1 // loop_footer_branch
      %17 = sbr.rel target = $region3
    $region8: #{tpu_custom_call.1} parent=1 // loop_exit
      _
    %612 = vsyncpa [#allocation4], 1
    %s613 = scalar_lea.sflag [#allocation4], 1
    %614 = vsyncpa %s613, 1

</llo_original>
